<compile_context>
chip_gen: v6e
topology: v6e:2x2x1
jax: 0.10.0
libtpu: 0.0.40
codegen_flags: <defaults>
</compile_context>

<pallas_src>
import functools

import jax
import jax.numpy as jnp
from jax.experimental import pallas as pl
from jax.experimental.pallas import tpu as pltpu


def _tpu_generation():
    """Best-effort TPU generation from device_kind (7 = v7x, 6 = v6e, ...)."""
    try:
        kind = jax.devices()[0].device_kind.lower()
    except Exception:          # no device visible at trace time
        return 6
    for g in (7, 6, 5, 4):
        if f"v{g}" in kind or f"tpu{g}" in kind or f"{g}x" in kind:
            return g
    return 6


def _vmem_budgets(gen):
    """(vmem_limit_bytes, tile_budget_bytes) per TPU generation."""
    if gen >= 7:               # 64 MiB physical VMEM per TensorCore -> headroom
        return 40 << 20, 20 << 20
    return 64 << 20, 32 << 20  # v5e / v6e: 128 MiB physical VMEM


def _pick_grid(batch, n_logits, in_itemsize, upcast_full, gen, tile_budget):
    """Pick (row_tile, num_tiles): largest multiple-of-8 row tile within the
    VMEM budget, then split into two equal tiles for the v7x dual-TC case."""
    cw = 4 if upcast_full else in_itemsize           # full-width compute dtype
    # Live VMEM per row: double-buffered input block (wire dtype) plus ~3
    # full-width temporaries (compute copy / work copy / select temp) and the
    # int32 lane iota.
    per_row = 2 * n_logits * in_itemsize + n_logits * (3 * cw + 4)
    cap = max(8, tile_budget // per_row)
    cap = min(cap, 1024)                             # near roofline beyond this
    tb = max(8, (cap // 8) * 8)

    b8 = ((batch + 7) // 8) * 8                      # batch rounded to sublanes
    tb = min(tb, b8)
    num = -(-b8 // tb)

    if gen >= 7 and num == 1 and b8 >= 16:
        # v7x has 2 TensorCores: give each core one (roughly) equal tile.
        tb = ((b8 // 2 + 7) // 8) * 8
        num = -(-b8 // tb)
    return tb, num


def _sparsemax_kernel(preds_ref, labels_ref, out_ref, *,
                      k_sparse, n_logits, batch, row_tile, upcast_full):
    x = preds_ref[...]                                # (tb, N) wire dtype
    if upcast_full:
        x = x.astype(jnp.float32)                     # v5e path (no bf16 VPU)
    labels = labels_ref[...]                          # (tb, 1) int32

    # Lane index per column; reused by the label gather and the top-k masking.
    # (Mosaic masks padded lanes in these reductions when N % 128 != 0, since
    #  the block equals the full logical array width.)
    col = jax.lax.broadcasted_iota(jnp.int32, (row_tile, n_logits), 1)

    # neg_loss: preds[b, labels[b]] via a masked lane reduction (no dynamic
    # gather).  Only one lane per row is non-zero, so the sum in the wire dtype
    # is exact; only the (tb, 1) result is upcast.
    # Out-of-range labels contribute 0 instead of torch.gather's clamped value.
    zero = jnp.zeros((), dtype=x.dtype)
    neg = jnp.sum(jnp.where(col == labels, x, zero), axis=1,
                  keepdims=True).astype(jnp.float32)

    # pos_loss: logsumexp over the top-k logits.  k_sparse is a small static
    # int, so unroll: take the row max in the wire dtype, fold the (tb,1) f32
    # statistic into an online logsumexp, and mask out exactly one occurrence
    # per iteration (tie order never changes the loss value).  The last
    # iteration skips the unused first-occurrence reduce and masking select;
    # the first iteration skips the trivial exp/max of the online update.
    work = x
    neg_inf = jnp.asarray(-jnp.inf, dtype=x.dtype)
    m = None
    s = None
    for i in range(k_sparse):
        cur_w = jnp.max(work, axis=1, keepdims=True)       # (tb, 1) wire dtype
        cur = cur_w.astype(jnp.float32)
        if i == 0:
            m = cur
            s = jnp.ones_like(cur)
        else:
            new_m = jnp.maximum(m, cur)
            s = s * jnp.exp(m - new_m) + jnp.exp(cur - new_m)
            m = new_m
        if i < k_sparse - 1:
            first_idx = jnp.min(jnp.where(work == cur_w, col, n_logits),
                                axis=1, keepdims=True)
            work = jnp.where(col == first_idx, neg_inf, work)
    pos = m + jnp.log(s)                                    # (tb, 1) f32

    # Per-tile partial sum, masking any padded rows; one (1, 1) value per grid
    # step (the tiny cross-tile mean happens in the wrapper).
    row = jax.lax.broadcasted_iota(jnp.int32, (row_tile, 1), 0)
    valid = (pl.program_id(0) * row_tile + row) < batch
    loss = jnp.where(valid, pos - neg, 0.0)
    out_ref[...] = jnp.sum(loss, axis=0, keepdims=True)


def sparsemax_loss(preds, labels, *, k_sparse=1, row_tile=None):
    """JAX wrapper mirroring SparseMax.forward."""
    B = preds.shape[0]
    preds2 = preds.reshape(B, -1)            # preds.reshape(preds.size(0), -1)
    N = preds2.shape[1]
    labels2 = labels.reshape(B, 1).astype(jnp.int32)

    gen = _tpu_generation()
    vmem_limit, tile_budget = _vmem_budgets(gen)

    # Keep the wire dtype on the DMA *and* (on bf16-VALU parts, v6e/v7x) in the
    # full-width in-kernel passes; v5e upcasts the tile to f32 in-kernel.
    upcast_full = (preds2.dtype.itemsize < 4) and (gen < 6)

    if row_tile is None:
        tb, num_tiles = _pick_grid(B, N, preds2.dtype.itemsize, upcast_full,
                                   gen, tile_budget)
    else:
        tb = row_tile
        num_tiles = -(-B // tb)
    assert tb % 8 == 0 or tb == B, (B, tb)

    # Pad the batch to a whole number of tiles; padded rows are masked
    # in-kernel so they contribute 0 to the partial sums.
    B_pad = num_tiles * tb
    if B_pad != B:
        preds2 = jnp.pad(preds2, ((0, B_pad - B), (0, 0)))
        labels2 = jnp.pad(labels2, ((0, B_pad - B), (0, 0)))

    # TODO(synk): for vocab-scale N where even an 8-row tile exceeds VMEM, add
    # an inner "arbitrary" column-tile grid axis that carries running top-k /
    # logsumexp state in VMEM scratch so the block footprint is N-independent.
    partials = pl.pallas_call(
        functools.partial(_sparsemax_kernel, k_sparse=k_sparse, n_logits=N,
                          batch=B, row_tile=tb, upcast_full=upcast_full),
        out_shape=jax.ShapeDtypeStruct((num_tiles, 1), jnp.float32),
        grid_spec=pltpu.PrefetchScalarGridSpec(
            num_scalar_prefetch=0,
            grid=(num_tiles,),
            in_specs=[
                pl.BlockSpec((tb, N), lambda i: (i, 0)),   # preds tile (wire dtype)
                pl.BlockSpec((tb, 1), lambda i: (i, 0)),   # labels column
            ],
            out_specs=pl.BlockSpec((1, 1), lambda i: (i, 0)),
        ),
        compiler_params=pltpu.CompilerParams(
            dimension_semantics=("parallel",),
            vmem_limit_bytes=vmem_limit),
    )(preds2, labels2)

    return jnp.sum(partials) / B             # final .mean() over the true batch


def _reference(preds, labels, k_sparse=1):
    """Pure-JAX reference matching the PyTorch module."""
    B = preds.shape[0]
    p = preds.reshape(B, -1).astype(jnp.float32)
    topk = jax.lax.top_k(p, k_sparse)[0]
    pos = jax.scipy.special.logsumexp(topk, axis=1)
    neg = jnp.take_along_axis(p, labels.reshape(B, 1), axis=1)[:, 0]
    return jnp.mean(pos - neg)


if __name__ == "__main__":
    key = jax.random.PRNGKey(0)
    k1, k2, k3, k4 = jax.random.split(key, 4)

    B, N = 16, 256                       # [batch_size, number_of_logits]
    preds = jax.random.normal(k1, (B, N), dtype=jnp.float32)
    labels = jax.random.randint(k2, (B,), 0, N, dtype=jnp.int32)

    # Default k_sparse=1 (module default).
    out1 = jax.block_until_ready(sparsemax_loss(preds, labels, k_sparse=1))
    ref1 = jax.block_until_ready(_reference(preds, labels, k_sparse=1))
    assert jnp.allclose(out1, ref1, atol=1e-5, rtol=1e-5), (out1, ref1)

    # k_sparse > 1 exercises the unrolled online-logsumexp top-k path.
    out3 = jax.block_until_ready(sparsemax_loss(preds, labels, k_sparse=3))
    ref3 = jax.block_until_ready(_reference(preds, labels, k_sparse=3))
    assert jnp.allclose(out3, ref3, atol=1e-5, rtol=1e-5), (out3, ref3)

    # bf16 stays bf16 on the wire (and in the full-width passes on v6e/v7x).
    preds_bf = preds.astype(jnp.bfloat16)
    outb = jax.block_until_ready(sparsemax_loss(preds_bf, labels, k_sparse=2))
    refb = jax.block_until_ready(
        _reference(preds_bf.astype(jnp.float32), labels, k_sparse=2))
    assert jnp.allclose(outb, refb, atol=1e-4, rtol=1e-4), (outb, refb)

    # Non-128-aligned N and non-multiple-of-8 batch: exercises the padded-lane
    # masking in the lane reductions and the padded-row masking in the kernel.
    B2, N2 = 10, 200
    preds_odd = jax.random.normal(k3, (B2, N2), dtype=jnp.float32)
    labels_odd = jax.random.randint(k4, (B2,), 0, N2, dtype=jnp.int32)
    out2 = jax.block_until_ready(sparsemax_loss(preds_odd, labels_odd, k_sparse=2))
    ref2 = jax.block_until_ready(_reference(preds_odd, labels_odd, k_sparse=2))
    assert jnp.allclose(out2, ref2, atol=1e-5, rtol=1e-5), (out2, ref2)

    print("KERNEL_OK")
</pallas_src>

<mosaic_0001>
module attributes {stable_mosaic.version = 11 : i64} {
  func.func @_sparsemax_kernel(%arg0: i32, %arg1: memref<16x256xf32, #tpu.memory_space<vmem>>, %arg2: memref<16x1xi32, #tpu.memory_space<vmem>>, %arg3: memref<1x1xf32, #tpu.memory_space<vmem>>) attributes {dimension_semantics = [#tpu.dimension_semantics<parallel>], iteration_bounds = array<i64: 1>, scalar_prefetch = 0 : i64, scratch_operands = 0 : i64, tpu.core_type = #tpu.core_type<tc>, window_params = [{transform_indices = @transform_0, window_bounds = array<i64: 16, 256>}, {transform_indices = @transform_1, window_bounds = array<i64: 16, 1>}, {transform_indices = @transform_2, window_bounds = array<i64: 1, 1>}]} {
    %c0 = arith.constant 0 : index
    %c0_0 = arith.constant 0 : index
    %0 = vector.load %arg1[%c0, %c0_0] : memref<16x256xf32, #tpu.memory_space<vmem>>, vector<16x256xf32>
    %c0_1 = arith.constant 0 : index
    %c0_2 = arith.constant 0 : index
    %1 = vector.load %arg2[%c0_1, %c0_2] : memref<16x1xi32, #tpu.memory_space<vmem>>, vector<16x1xi32>
    %2 = tpu.iota {dimensions = array<i32: 1>} : vector<16x256xi32>
    %3 = vector.broadcast %1 : vector<16x1xi32> to vector<16x256xi32>
    %4 = arith.cmpi eq, %2, %3 : vector<16x256xi32>
    %cst = arith.constant 0.000000e+00 : f32
    %5 = vector.broadcast %cst : f32 to vector<16x256xf32>
    %6 = arith.select %4, %0, %5 : vector<16x256xi1>, vector<16x256xf32>
    %cst_3 = arith.constant dense<0.000000e+00> : vector<16xf32>
    %7 = vector.multi_reduction <add>, %6, %cst_3 [1] : vector<16x256xf32> to vector<16xf32>
    %8 = vector.shape_cast %7 : vector<16xf32> to vector<16x1xf32>
    %cst_4 = arith.constant dense<0xFF800000> : vector<16xf32>
    %9 = vector.multi_reduction <maximumf>, %0, %cst_4 [1] : vector<16x256xf32> to vector<16xf32>
    %10 = vector.shape_cast %9 : vector<16xf32> to vector<16x1xf32>
    %cst_5 = arith.constant 1.000000e+00 : f32
    %11 = vector.broadcast %cst_5 : f32 to vector<16x1xf32>
    %12 = math.log %11 : vector<16x1xf32>
    %13 = arith.addf %10, %12 : vector<16x1xf32>
    %14 = tpu.iota {dimensions = array<i32: 0>} : vector<16x1xi32>
    %c16_i32 = arith.constant 16 : i32
    %15 = arith.muli %arg0, %c16_i32 : i32
    %16 = vector.broadcast %15 : i32 to vector<16x1xi32>
    %17 = arith.addi %16, %14 : vector<16x1xi32>
    %c16_i32_6 = arith.constant 16 : i32
    %18 = vector.broadcast %c16_i32_6 : i32 to vector<16x1xi32>
    %19 = arith.cmpi slt, %17, %18 : vector<16x1xi32>
    %20 = arith.subf %13, %8 : vector<16x1xf32>
    %cst_7 = arith.constant 0.000000e+00 : f32
    %21 = vector.broadcast %cst_7 : f32 to vector<16x1xf32>
    %22 = arith.select %19, %20, %21 : vector<16x1xi1>, vector<16x1xf32>
    %cst_8 = arith.constant dense<0.000000e+00> : vector<1xf32>
    %23 = vector.multi_reduction <add>, %22, %cst_8 [0] : vector<16x1xf32> to vector<1xf32>
    %24 = vector.shape_cast %23 : vector<1xf32> to vector<1x1xf32>
    %c0_9 = arith.constant 0 : index
    %c0_10 = arith.constant 0 : index
    %25 = vector.load %arg3[%c0_9, %c0_10] : memref<1x1xf32, #tpu.memory_space<vmem>>, vector<1x1xf32>
    tpu.vector_store %arg3[%c0_9, %c0_10], %24 {strides = array<i32>} : memref<1x1xf32, #tpu.memory_space<vmem>>, vector<1x1xf32>,
    return
  }
  func.func @transform_0(%arg0: i32) -> (i32, i32) {
    %c0_i32 = arith.constant 0 : i32
    %c0_i32_0 = arith.constant 0 : i32
    return %arg0, %c0_i32 : i32, i32
  }
  func.func @transform_1(%arg0: i32) -> (i32, i32) {
    %c0_i32 = arith.constant 0 : i32
    %c0_i32_0 = arith.constant 0 : i32
    return %arg0, %c0_i32 : i32, i32
  }
  func.func @transform_2(%arg0: i32) -> (i32, i32) {
    %c0_i32 = arith.constant 0 : i32
    %c0_i32_0 = arith.constant 0 : i32
    return %arg0, %c0_i32 : i32, i32
  }
}

</mosaic_0001>

<llo_original>
// kernel: tpu_custom_call.1
$region0: #{tpu_custom_call.1}
  #allocation0 [shape = 'u32[]', space=smem, size = 0x4, offset = 0x4, fixed_abs, tag = 'smem constant byte address 0x4 - core index']
  #allocation1 [shape = 'u32[144,128]{1,0:T(1,128)}', space=vmem, size = 0x12000, scoped, tag = 'internal scratch']
  %s0 = inlined_call_operand.hbm [shape: f32[16,256], index: 0, kind: input, shape index: {}]
  %s1 = inlined_call_operand.vmem [shape: s32[16,1], index: 1, kind: input, shape index: {}]
  %s2 = inlined_call_operand.hbm [shape: f32[1,1], index: 2, kind: output, shape index: {}]
  %s3 = sld [smem:[#allocation0]]
  $region22: #{tpu_custom_call.1} parent=0
    _
  %s5 = ssub.s32 1, %s3
  %s6 = scalar_select 0, %s5, %s3
  $region1: #{tpu_custom_call.1} parent=0
    #allocation2 [shape = 'u8[16384]{0}', space=vmem, size = 0x4000, scoped, tag = 'input window, operand 0, single buffered']
    #allocation3 [shape = 's32[1]{0}', space=sflag, size = 0x4, scoped, tag = 'scoped memory for tpu_custom_call.1']
    #allocation4 [shape = 's32[1]{0}', space=sflag, size = 0x4, scoped, tag = 'scoped memory for tpu_custom_call.1']
    #allocation5 [shape = 'u8[512]{0}', space=vmem, size = 0x400, scoped, tag = 'output window, operand 0, single buffered']
    %7 = vsyncpa [#allocation3], 0
    %8 = vsyncpa [#allocation4], 0
    // Predicated region
    $region2: #{tpu_custom_call.1} parent=1 // pred_check
      _
    $region3: #{tpu_custom_call.1} parent=1 // pred_check_branch
      %10 = sbr.rel (0) target = $region5
    $region4: #{tpu_custom_call.1} parent=1 // pred_region
      %s12 = ssub.s32 512, 512
      %13 = vsyncadd [#allocation3], %s12
      %s14 = sshll.u32 [#allocation2], 4
      %s15 = int_to_ptr.vmem [resolvable:$true] %s14
      %20 = dma.hbm_to_vmem [thread:$0]  %s0, 512, %s15, [#allocation3], 256, 256, 16
    $region5: #{tpu_custom_call.1} parent=1 // pred_fallthru
      _
    // Predicated region
    $region6: #{tpu_custom_call.1} parent=1 // pred_check
      _
    $region7: #{tpu_custom_call.1} parent=1 // pred_check_branch
      %22 = sbr.rel (0) target = $region9
    $region8: #{tpu_custom_call.1} parent=1 // pred_region
      _
    $region9: #{tpu_custom_call.1} parent=1 // pred_fallthru
      _
    // Predicated region
    $region10: #{tpu_custom_call.1} parent=1 // pred_check
      _
    $region11: #{tpu_custom_call.1} parent=1 // pred_check_branch
      %24 = sbr.rel (0) target = $region13
    $region12: #{tpu_custom_call.1} parent=1 // pred_region
      %25 = dma.done [#allocation3], 512
    $region13: #{tpu_custom_call.1} parent=1 // pred_fallthru
      _
    %v26 = vld [vmem:[#allocation2] sm:$0xff]
    %v27 = vld [vmem:[#allocation2 + $0x8] sm:$0xff]
    %v28 = vld [vmem:[#allocation2 + $0x10] sm:$0xff]
    %v29 = vld [vmem:[#allocation2 + $0x18] sm:$0xff]
    %v30 = vld [vmem:[%s1] sm:$0xff]
    %v31 = vld [vmem:[%s1 + $0x8] sm:$0xff]
    %v32 = vlaneseq
    %v33 = vand.u32 %v32, 127
    %v34 = vadd.s32 %v33, 128
    %35 = vset.pattern.permute.xlu0 0
    %36 = vperm.xlu0 %35, %v30
    %v37 = vpop.permute.xlu0 %36
    %38 = vset.pattern.permute.xlu0 0
    %39 = vperm.xlu0 %38, %v31
    %v40 = vpop.permute.xlu0 %39
    %vm41 = vcmp.eq.s32.totalorder %v33, %v37
    %vm42 = vcmp.eq.s32.totalorder %v34, %v37
    %vm43 = vcmp.eq.s32.totalorder %v33, %v40
    %vm44 = vcmp.eq.s32.totalorder %v34, %v40
    %v45 = vsel %vm41, %v26, 0.0
    %v46 = vsel %vm42, %v27, 0.0
    %v47 = vsel %vm43, %v28, 0.0
    %v48 = vsel %vm44, %v29, 0.0
    %v49 = vadd.f32 %v45, %v46
    %50 = vadd.xlane.f32.xlu0 %v49
    %v51 = vpop.xlane.xlu0 %50
    %v52 = vadd.f32 %v47, %v48
    %53 = vadd.xlane.f32.xlu0 %v52
    %v54 = vpop.xlane.xlu0 %53
    %v55 = vmax.f32 %v26, %v27
    %56 = vmax.xlane.f32.xlu0 %v55
    %v57 = vpop.xlane.xlu0 %56
    %v58 = vmax.f32 %v28, %v29
    %59 = vmax.xlane.f32.xlu0 %v58
    %v60 = vpop.xlane.xlu0 %59
    %v61 = vadd.f32 %v57, 0.0
    %v62 = vadd.f32 %v60, 0.0
    %v63 = vlaneseq
    %v64 = vshrl.u32 %v63, 7
    %v65 = vadd.s32 %v64, 8
    %s66 = smul.u32 0, 16
    %v67 = vstv %s66
    %v68 = vadd.s32 %v67, %v64
    %v69 = vadd.s32 %v67, %v65
    %vm70 = vcmp.lt.s32.totalorder %v68, 16
    %vm71 = vcmp.lt.s32.totalorder %v69, 16
    %v72 = vsub.f32 %v61, %v51
    %v73 = vsub.f32 %v62, %v54
    %v74 = vsel %vm70, %v72, 0.0
    %v75 = vsel %vm71, %v73, 0.0
    %v76 = vadd.f32 %v74, %v75
    %v77 = vrot.slane %v76, 4
    %v78 = vadd.f32 %v76, %v77
    %v79 = vrot.slane %v78, 2
    %v80 = vadd.f32 %v78, %v79
    %v81 = vrot.slane %v80, 1
    %v82 = vadd.f32 %v80, %v81
    %vm83 = vcmask 0
    %84 = vst.msk [vmem:[#allocation5] sm:$0x1] %vm83, %v82
    // Predicated region
    $region14: #{tpu_custom_call.1} parent=1 // pred_check
      _
    $region15: #{tpu_custom_call.1} parent=1 // pred_check_branch
      %86 = sbr.rel (0) target = $region17
    $region16: #{tpu_custom_call.1} parent=1 // pred_region
      %s88 = ssub.s32 16, 16
      %89 = vsyncadd [#allocation4], %s88
      %s91 = sshll.u32 [#allocation5], 4
      %s92 = int_to_ptr.vmem [resolvable:$true] %s91
      %94 = dma.vmem_to_hbm [thread:$0]  %s92, 16, %s2, [#allocation4]
    $region17: #{tpu_custom_call.1} parent=1 // pred_fallthru
      _
    // Predicated region
    $region18: #{tpu_custom_call.1} parent=1 // pred_check
      _
    $region19: #{tpu_custom_call.1} parent=1 // pred_check_branch
      %96 = sbr.rel (0) target = $region21
    $region20: #{tpu_custom_call.1} parent=1 // pred_region
      %97 = dma.done [#allocation4], 16
    $region21: #{tpu_custom_call.1} parent=1 // pred_fallthru
      _
    %98 = vsyncpa [#allocation3], 1
    %99 = vsyncpa [#allocation4], 1

</llo_original>
